<compile_context>
chip_gen: v5e
topology: v5e:2x2
jax: 0.10.0
libtpu: 0.0.40
codegen_flags: <defaults>
</compile_context>

<pallas_src>
import functools

import jax
import jax.numpy as jnp
from jax.experimental import pallas as pl
from jax.experimental.pallas import tpu as pltpu

_SUBLANE = 8      # f32 sublane width (second-to-last dim)
_MIN_TILE = 128   # smallest batch tile worth splitting across TensorCores


def _round_down(n, m):
    return (n // m) * m


def _num_tensorcores():
    """2 on v7x (2 TC/chip), 1 on v5e/v6e. Best-effort, defaults to 1."""
    try:
        kind = (jax.devices()[0].device_kind or "").lower()
    except Exception:
        return 1
    return 2 if "v7" in kind else 1


# ----------------------------------------------------------------------------
# Fused MLP kernel: the whole Linear(+Tanh) stack runs in one kernel body.
# refs = (x_ref, w0_ref, b0_ref, ..., w{n-1}_ref, b{n-1}_ref, o_ref)
# ----------------------------------------------------------------------------
def _mlp_kernel(*refs, num_layers: int):
    x_ref = refs[0]
    o_ref = refs[-1]
    wb = refs[1:-1]

    h = x_ref[...].astype(jnp.float32)
    for i in range(num_layers):            # unrolled at trace time (tiny, fixed)
        w = wb[2 * i][...]
        b = wb[2 * i + 1][...]              # (1, Fout) f32, broadcast once/layer
        # MXU matmul with f32 accumulation; weights may be bf16 (fast MXU path)
        # while bias-add + tanh stay f32 (VPU/EUP-friendly on v5e).
        lhs = h if w.dtype == h.dtype else h.astype(w.dtype)
        h = jnp.dot(lhs, w, preferred_element_type=jnp.float32)
        h = h + b
        if i < num_layers - 1:
            h = jnp.tanh(h)
    o_ref[...] = h.astype(o_ref.dtype)


def _mlp_forward(flat_params, x, *, batch_tile: int, num_tc: int):
    """Fused forward over real-width (unpadded) buffers.

    flat_params: (w0, b0, w1, b1, ...) at real widths.
    x:           (B, Fin) activations.
    Returns (B, Fout) float32.
    """
    num_layers = len(flat_params) // 2
    fin = flat_params[0].shape[0]
    fout = flat_params[-2].shape[1]
    B = x.shape[0]

    x = x.astype(jnp.float32)
    kernel = functools.partial(_mlp_kernel, num_layers=num_layers)
    out_shape = jax.ShapeDtypeStruct((B, fout), jnp.float32)

    # --- choose batch tiling (trace-time: B is static under jit) ------------
    tile = None
    if B > batch_tile:
        tile = batch_tile
    elif num_tc >= 2 and B >= num_tc * _MIN_TILE:
        # v7x: prefer the grid path once the batch is big enough for 2 tiles.
        tile = batch_tile
    if tile is not None and num_tc >= 2:
        # Guarantee >= num_tc grid steps so "parallel" splits across both TCs.
        cap = max(_MIN_TILE, _round_down(B // num_tc, _SUBLANE))
        tile = min(tile, cap)

    if tile is None:
        # Single-shot fused kernel: no grid machinery, everything VMEM-resident.
        return pl.pallas_call(
            kernel,
            out_shape=out_shape,
            in_specs=[pl.BlockSpec(memory_space=pltpu.MemorySpace.VMEM)]
                     * (1 + 2 * num_layers),
            out_specs=pl.BlockSpec(memory_space=pltpu.MemorySpace.VMEM),
        )(x, *flat_params)

    # Large batch: tile only the batch axis (pl.cdiv grid handles a ragged last
    # tile via clamped DMA; compute is row-independent so stale tail rows are
    # harmless and never written back).  Weights/biases use constant index_maps
    # so they stay VMEM-resident across grid steps; the batch axis is
    # "parallel" so v7x's two TensorCores split it (no-op on v5e/v6e).
    in_specs = [pl.BlockSpec((tile, fin), lambda i: (i, 0))]
    for p in flat_params:
        in_specs.append(pl.BlockSpec(p.shape, lambda i: (0, 0)))
    return pl.pallas_call(
        kernel,
        out_shape=out_shape,
        grid=(pl.cdiv(B, tile),),
        in_specs=in_specs,
        out_specs=pl.BlockSpec((tile, fout), lambda i: (i, 0)),
        compiler_params=pltpu.CompilerParams(
            dimension_semantics=("parallel",)),
    )(x, *flat_params)


# ----------------------------------------------------------------------------
# Deterministic parameter init (matches reset_parameters: orthogonal weights,
# zero bias).  No checkpoint loading.
# ----------------------------------------------------------------------------
def _orthogonal(key, fan_in, fan_out, gain=1.0):
    a = jax.random.normal(key, (max(fan_in, fan_out), min(fan_in, fan_out)),
                          dtype=jnp.float32)
    q, r = jnp.linalg.qr(a)
    d = jnp.diag(r)
    q = q * jnp.where(d >= 0, 1.0, -1.0)[None, :]   # robust sign (no zeros)
    if fan_in < fan_out:
        q = q.T
    return gain * q[:fan_in, :fan_out]


class ClosedControllerPallas:
    """JAX/Pallas port of ClosedController (inference forward).

    dropout > 0 in the reference only inserts nn.Dropout before the last
    Linear; at inference it is the identity, so it is a no-op here.
    """

    def __init__(self, widths, key, dropout=0.0, gain=1.0, last_w=1.0,
                 param_dtype=jnp.bfloat16, batch_tile=512):
        assert batch_tile % _SUBLANE == 0 and batch_tile >= _SUBLANE
        self.widths = list(widths)
        num_layers = len(widths) - 1
        num_tc = _num_tensorcores()

        self.reference_params = []   # f32 (w, b, apply_tanh) for checks
        flat = []
        for i in range(num_layers):
            key, kw = jax.random.split(key)
            g = gain * last_w if i == num_layers - 1 else gain
            w = _orthogonal(kw, widths[i], widths[i + 1], gain=g)  # (in, out)
            b = jnp.zeros((widths[i + 1],), jnp.float32)
            self.reference_params.append((w, b, i < num_layers - 1))
            # Real widths, no HBM padding; weights in param_dtype, bias f32.
            flat.extend([w.astype(param_dtype),
                         b.reshape(1, widths[i + 1]).astype(jnp.float32)])
        self._flat_params = tuple(flat)

        def _fwd(flat_params, x):
            return _mlp_forward(flat_params, x,
                                batch_tile=batch_tile, num_tc=num_tc)

        # One jit-compiled executable: fused Pallas MLP, exact output shape.
        self._forward = jax.jit(_fwd)

    def __call__(self, x, prev_a=None):
        # TODO(synk): the reference ClosedController.forward(x, prev_a) raises
        # NotImplementedError; we implement the canonical layer-stack forward
        # over x (prev_a is accepted for signature parity but unused).
        return self._forward(self._flat_params, x)


# ----------------------------------------------------------------------------
# Pure-JAX reference for correctness check.
# ----------------------------------------------------------------------------
def _reference_forward(params, x):
    for w, b, apply_tanh in params:
        x = x @ w + b
        if apply_tanh:
            x = jnp.tanh(x)
    return x


if __name__ == "__main__":
    key = jax.random.PRNGKey(0)
    widths = [16, 32, 32, 8]   # [in_features, hidden, hidden, out_features]
    k_init, k_x1, k_x2, k_a = jax.random.split(key, 4)

    # --- f32 weights: strict check against the pure-JAX reference -----------
    ctrl_f32 = ClosedControllerPallas(widths, k_init, dropout=0.0,
                                      param_dtype=jnp.float32, batch_tile=128)

    # Small batch: single-shot fused kernel (whole arrays VMEM-resident).
    batch = 4
    x = jax.random.normal(k_x1, (batch, widths[0]), dtype=jnp.float32)
    prev_a = jax.random.normal(k_a, (batch, widths[-1]), dtype=jnp.float32)
    out = jax.block_until_ready(ctrl_f32(x, prev_a))
    ref = _reference_forward(ctrl_f32.reference_params, x)
    assert out.shape == (batch, widths[-1])
    assert jnp.allclose(out, ref, atol=1e-5, rtol=1e-5), "small-batch mismatch"

    # Larger batch: exercises the batch-tiled ("parallel") grid path with a
    # ragged last tile (300 = 2*128 + 44).
    batch2 = 300
    x2 = jax.random.normal(k_x2, (batch2, widths[0]), dtype=jnp.float32)
    out2 = jax.block_until_ready(ctrl_f32(x2))
    ref2 = _reference_forward(ctrl_f32.reference_params, x2)
    assert out2.shape == (batch2, widths[-1])
    assert jnp.allclose(out2, ref2, atol=1e-5, rtol=1e-5), "tiled-batch mismatch"

    # --- default bf16 weights (MXU fast path), looser tolerance -------------
    ctrl_bf16 = ClosedControllerPallas(widths, k_init, batch_tile=128)
    out3 = jax.block_until_ready(ctrl_bf16(x2))
    ref3 = _reference_forward(ctrl_bf16.reference_params, x2)
    assert out3.shape == (batch2, widths[-1])
    assert jnp.allclose(out3, ref3, atol=5e-2, rtol=5e-2), "bf16 mismatch"

    print("KERNEL_OK")
</pallas_src>

<mosaic_0001>
module attributes {stable_mosaic.version = 11 : i64} {
  func.func @_mlp_kernel(%arg0: memref<4x16xf32, #tpu.memory_space<vmem>>, %arg1: memref<16x32xf32, #tpu.memory_space<vmem>>, %arg2: memref<1x32xf32, #tpu.memory_space<vmem>>, %arg3: memref<32x32xf32, #tpu.memory_space<vmem>>, %arg4: memref<1x32xf32, #tpu.memory_space<vmem>>, %arg5: memref<32x8xf32, #tpu.memory_space<vmem>>, %arg6: memref<1x8xf32, #tpu.memory_space<vmem>>, %arg7: memref<4x8xf32, #tpu.memory_space<vmem>>) attributes {dimension_semantics = [], scalar_prefetch = 0 : i64, scratch_operands = 0 : i64, tpu.core_type = #tpu.core_type<tc>} {
    %c0 = arith.constant 0 : index
    %c0_0 = arith.constant 0 : index
    %0 = vector.load %arg0[%c0, %c0_0] : memref<4x16xf32, #tpu.memory_space<vmem>>, vector<4x16xf32>
    %c0_1 = arith.constant 0 : index
    %c0_2 = arith.constant 0 : index
    %1 = vector.load %arg1[%c0_1, %c0_2] : memref<16x32xf32, #tpu.memory_space<vmem>>, vector<16x32xf32>
    %c0_3 = arith.constant 0 : index
    %c0_4 = arith.constant 0 : index
    %2 = vector.load %arg2[%c0_3, %c0_4] : memref<1x32xf32, #tpu.memory_space<vmem>>, vector<1x32xf32>
    %cst = arith.constant dense<0.000000e+00> : vector<4x32xf32>
    %3 = tpu.matmul %0, %1, %cst {dimension_numbers = #tpu.dot_dimension_numbers<[1], [0], [0], [1], [0, 0, 1, 1], [], []>} : vector<4x16xf32>, vector<16x32xf32>, vector<4x32xf32> -> vector<4x32xf32>
    %4 = vector.broadcast %2 : vector<1x32xf32> to vector<4x32xf32>
    %5 = arith.addf %3, %4 : vector<4x32xf32>
    %6 = math.tanh %5 : vector<4x32xf32>
    %c0_5 = arith.constant 0 : index
    %c0_6 = arith.constant 0 : index
    %7 = vector.load %arg3[%c0_5, %c0_6] : memref<32x32xf32, #tpu.memory_space<vmem>>, vector<32x32xf32>
    %c0_7 = arith.constant 0 : index
    %c0_8 = arith.constant 0 : index
    %8 = vector.load %arg4[%c0_7, %c0_8] : memref<1x32xf32, #tpu.memory_space<vmem>>, vector<1x32xf32>
    %cst_9 = arith.constant dense<0.000000e+00> : vector<4x32xf32>
    %9 = tpu.matmul %6, %7, %cst_9 {dimension_numbers = #tpu.dot_dimension_numbers<[1], [0], [0], [1], [0, 0, 1, 1], [], []>} : vector<4x32xf32>, vector<32x32xf32>, vector<4x32xf32> -> vector<4x32xf32>
    %10 = vector.broadcast %8 : vector<1x32xf32> to vector<4x32xf32>
    %11 = arith.addf %9, %10 : vector<4x32xf32>
    %12 = math.tanh %11 : vector<4x32xf32>
    %c0_10 = arith.constant 0 : index
    %c0_11 = arith.constant 0 : index
    %13 = vector.load %arg5[%c0_10, %c0_11] : memref<32x8xf32, #tpu.memory_space<vmem>>, vector<32x8xf32>
    %c0_12 = arith.constant 0 : index
    %c0_13 = arith.constant 0 : index
    %14 = vector.load %arg6[%c0_12, %c0_13] : memref<1x8xf32, #tpu.memory_space<vmem>>, vector<1x8xf32>
    %cst_14 = arith.constant dense<0.000000e+00> : vector<4x8xf32>
    %15 = tpu.matmul %12, %13, %cst_14 {dimension_numbers = #tpu.dot_dimension_numbers<[1], [0], [0], [1], [0, 0, 1, 1], [], []>} : vector<4x32xf32>, vector<32x8xf32>, vector<4x8xf32> -> vector<4x8xf32>
    %16 = vector.broadcast %14 : vector<1x8xf32> to vector<4x8xf32>
    %17 = arith.addf %15, %16 : vector<4x8xf32>
    %c0_15 = arith.constant 0 : index
    %c0_16 = arith.constant 0 : index
    %18 = vector.load %arg7[%c0_15, %c0_16] : memref<4x8xf32, #tpu.memory_space<vmem>>, vector<4x8xf32>
    tpu.vector_store %arg7[%c0_15, %c0_16], %17 {strides = array<i32>} : memref<4x8xf32, #tpu.memory_space<vmem>>, vector<4x8xf32>,
    return
  }
}

</mosaic_0001>

<llo_original>
// kernel: _fwd.1
$region0: #{_fwd.1}
  #allocation0 [shape = 'u32[]', space=smem, size = 0x4, offset = 0x4, fixed_abs, tag = 'smem constant byte address 0x4 - core index']
  #allocation1 [shape = 'u32[72,128]{1,0:T(1,128)}', space=vmem, size = 0x9000, scoped, tag = 'internal scratch']
  %s0 = inlined_call_operand.vmem [shape: f32[4,16], index: 0, kind: input, shape index: {}]
  %s1 = inlined_call_operand.hbm [shape: f32[16,32], index: 1, kind: input, shape index: {}]
  %s2 = inlined_call_operand.vmem [shape: f32[1,32], index: 2, kind: input, shape index: {}]
  %s3 = inlined_call_operand.vmem [shape: f32[32,32], index: 3, kind: input, shape index: {}]
  %s4 = inlined_call_operand.vmem [shape: f32[1,32], index: 4, kind: input, shape index: {}]
  %s5 = inlined_call_operand.vmem [shape: f32[32,8], index: 5, kind: input, shape index: {}]
  %s6 = inlined_call_operand.vmem [shape: f32[1,8], index: 6, kind: input, shape index: {}]
  %s7 = inlined_call_operand.hbm [shape: f32[4,8], index: 7, kind: output, shape index: {}]
  %s8 = sld [smem:[#allocation0]]
  $region42: #{_fwd.1} parent=0
    _
  %s10 = ssub.s32 1, %s8
  %s11 = scalar_select 0, %s10, %s8
  $region1: #{_fwd.1} parent=0
    #allocation2 [shape = 'u8[8192]{0}', space=vmem, size = 0x2000, scoped, tag = 'input window, operand 1, single buffered']
    #allocation3 [shape = 's32[1]{0}', space=sflag, size = 0x4, scoped, tag = 'scoped memory for _fwd.1']
    #allocation4 [shape = 's32[1]{0}', space=sflag, size = 0x4, scoped, tag = 'scoped memory for _fwd.1']
    #allocation5 [shape = 'u8[2048]{0}', space=vmem, size = 0x800, scoped, tag = 'output window, operand 0, single buffered']
    %12 = vsyncpa [#allocation3], 0
    %13 = vsyncpa [#allocation4], 0
    // Predicated region
    $region2: #{_fwd.1} parent=1 // pred_check
      _
    $region3: #{_fwd.1} parent=1 // pred_check_branch
      %15 = sbr.rel (0) target = $region5
    $region4: #{_fwd.1} parent=1 // pred_region
      _
    $region5: #{_fwd.1} parent=1 // pred_fallthru
      _
    // Predicated region
    $region6: #{_fwd.1} parent=1 // pred_check
      _
    $region7: #{_fwd.1} parent=1 // pred_check_branch
      %17 = sbr.rel (0) target = $region9
    $region8: #{_fwd.1} parent=1 // pred_region
      %19 = vsyncadd [#allocation3], 0
      %s20 = sshll.u32 %s1, 4
      %s21 = int_to_ptr.hbm [resolvable:$true] %s20
      %s22 = sshll.u32 [#allocation2], 4
      %s23 = int_to_ptr.vmem [resolvable:$true] %s22
      %28 = dma.hbm_to_vmem [thread:$0]  %s21, 256, %s23, [#allocation3], 128, 128, 8
    $region9: #{_fwd.1} parent=1 // pred_fallthru
      _
    // Predicated region
    $region10: #{_fwd.1} parent=1 // pred_check
      _
    $region11: #{_fwd.1} parent=1 // pred_check_branch
      %30 = sbr.rel (0) target = $region13
    $region12: #{_fwd.1} parent=1 // pred_region
      _
    $region13: #{_fwd.1} parent=1 // pred_fallthru
      _
    // Predicated region
    $region14: #{_fwd.1} parent=1 // pred_check
      _
    $region15: #{_fwd.1} parent=1 // pred_check_branch
      %32 = sbr.rel (0) target = $region17
    $region16: #{_fwd.1} parent=1 // pred_region
      _
    $region17: #{_fwd.1} parent=1 // pred_fallthru
      _
    // Predicated region
    $region18: #{_fwd.1} parent=1 // pred_check
      _
    $region19: #{_fwd.1} parent=1 // pred_check_branch
      %34 = sbr.rel (0) target = $region21
    $region20: #{_fwd.1} parent=1 // pred_region
      _
    $region21: #{_fwd.1} parent=1 // pred_fallthru
      _
    // Predicated region
    $region22: #{_fwd.1} parent=1 // pred_check
      _
    $region23: #{_fwd.1} parent=1 // pred_check_branch
      %36 = sbr.rel (0) target = $region25
    $region24: #{_fwd.1} parent=1 // pred_region
      _
    $region25: #{_fwd.1} parent=1 // pred_fallthru
      _
    // Predicated region
    $region26: #{_fwd.1} parent=1 // pred_check
      _
    $region27: #{_fwd.1} parent=1 // pred_check_branch
      %38 = sbr.rel (0) target = $region29
    $region28: #{_fwd.1} parent=1 // pred_region
      _
    $region29: #{_fwd.1} parent=1 // pred_fallthru
      _
    // Predicated region
    $region30: #{_fwd.1} parent=1 // pred_check
      _
    $region31: #{_fwd.1} parent=1 // pred_check_branch
      %40 = sbr.rel (0) target = $region33
    $region32: #{_fwd.1} parent=1 // pred_region
      %42 = dma.done [#allocation3], 256
    $region33: #{_fwd.1} parent=1 // pred_fallthru
      _
    %v43 = vld [vmem:[%s0] sm:$0xf]
    %v44 = vld [vmem:[#allocation2] sm:$0xff]
    %v45 = vld [vmem:[#allocation2 + $0x8] sm:$0xff]
    %v46 = vld [vmem:[%s2] sm:$0x1]
    %v48 = vperm.slane %v46, 0
    %vm50 = vcmask 130048
    %v52 = vsel %vm50, %v43, 0
    %54 = vmatpush.msra.mxu0 0.0
    %55 = vmatpush.msra.mxu0 0.0
    %56 = vmatpush.msra.mxu0 0.0
    %57 = vmatpush.msra.mxu0 0.0
    %58 = vmatpush.msra.mxu0 0.0
    %59 = vmatpush.msra.mxu0 0.0
    %60 = vmatpush.msra.mxu0 0.0
    %61 = vmatpush.msra.mxu0 0.0
    %62 = vmatpush.msra.mxu0 0.0
    %63 = vmatpush.msra.mxu0 0.0
    %64 = vmatpush.msra.mxu0 0.0
    %65 = vmatpush.msra.mxu0 0.0
    %66 = vmatpush.msra.mxu0 0.0
    %67 = vmatpush.msra.mxu0 0.0
    %68 = vmatpush.msra.mxu0 %v45
    %69 = vmatpush.msra.mxu0 %v44
    %70 = vmatmul.f32.gmra.mxu0 %v52
    %v71 = vpop.f32.mrf.mxu0
    %v72 = vadd.f32 %v48, %v71
    %73 = vdwg.mxu0
    %v74 = vtanh.pop %v72
    %v75 = vld [vmem:[%s3] sm:$0xff]
    %v76 = vld [vmem:[%s3 + $0x8] sm:$0xff]
    %v77 = vld [vmem:[%s3 + $0x10] sm:$0xff]
    %v78 = vld [vmem:[%s3 + $0x18] sm:$0xff]
    %v79 = vld [vmem:[%s4] sm:$0x1]
    %v81 = vperm.slane %v79, 0
    %vm83 = vcmask 261120
    %v85 = vsel %vm83, %v74, 0
    %87 = vmatpush.msra.mxu0 0.0
    %88 = vmatpush.msra.mxu0 0.0
    %89 = vmatpush.msra.mxu0 0.0
    %90 = vmatpush.msra.mxu0 0.0
    %91 = vmatpush.msra.mxu0 0.0
    %92 = vmatpush.msra.mxu0 0.0
    %93 = vmatpush.msra.mxu0 0.0
    %94 = vmatpush.msra.mxu0 0.0
    %95 = vmatpush.msra.mxu0 0.0
    %96 = vmatpush.msra.mxu0 0.0
    %97 = vmatpush.msra.mxu0 0.0
    %98 = vmatpush.msra.mxu0 0.0
    %99 = vmatpush.msra.mxu0 %v78
    %100 = vmatpush.msra.mxu0 %v77
    %101 = vmatpush.msra.mxu0 %v76
    %102 = vmatpush.msra.mxu0 %v75
    %103 = vmatmul.f32.gmra.mxu0 %v85
    %v104 = vpop.f32.mrf.mxu0
    %v105 = vadd.f32 %v81, %v104
    %106 = vdwg.mxu0
    %v107 = vtanh.pop %v105
    %v108 = vld [vmem:[%s5] sm:$0xff]
    %v109 = vld [vmem:[%s5 + $0x8] sm:$0xff]
    %v110 = vld [vmem:[%s5 + $0x10] sm:$0xff]
    %v111 = vld [vmem:[%s5 + $0x18] sm:$0xff]
    %v112 = vld [vmem:[%s6] sm:$0x1]
    %v114 = vperm.slane %v112, 0
    %v117 = vsel %vm83, %v107, 0
    %119 = vmatpush.msra.mxu0 0.0
    %120 = vmatpush.msra.mxu0 0.0
    %121 = vmatpush.msra.mxu0 0.0
    %122 = vmatpush.msra.mxu0 0.0
    %123 = vmatpush.msra.mxu0 0.0
    %124 = vmatpush.msra.mxu0 0.0
    %125 = vmatpush.msra.mxu0 0.0
    %126 = vmatpush.msra.mxu0 0.0
    %127 = vmatpush.msra.mxu0 0.0
    %128 = vmatpush.msra.mxu0 0.0
    %129 = vmatpush.msra.mxu0 0.0
    %130 = vmatpush.msra.mxu0 0.0
    %131 = vmatpush.msra.mxu0 %v111
    %132 = vmatpush.msra.mxu0 %v110
    %133 = vmatpush.msra.mxu0 %v109
    %134 = vmatpush.msra.mxu0 %v108
    %135 = vmatmul.f32.gmra.mxu0 %v117
    %v136 = vpop.f32.mrf.mxu0
    %v137 = vadd.f32 %v114, %v136
    %138 = vdwg.mxu0
    %vm139 = vcmask 60416
    %140 = vst.msk [vmem:[#allocation5] sm:$0xf] %vm139, %v137
    // Predicated region
    $region34: #{_fwd.1} parent=1 // pred_check
      _
    $region35: #{_fwd.1} parent=1 // pred_check_branch
      %142 = sbr.rel (0) target = $region37
    $region36: #{_fwd.1} parent=1 // pred_region
      %144 = vsyncadd [#allocation4], 0
      %s146 = sshll.u32 [#allocation5], 4
      %s147 = int_to_ptr.vmem [resolvable:$true] %s146
      %s148 = sshll.u32 %s7, 4
      %s149 = int_to_ptr.hbm [resolvable:$true] %s148
      %151 = dma.vmem_to_hbm [thread:$0]  %s147, 64, %s149, [#allocation4]
    $region37: #{_fwd.1} parent=1 // pred_fallthru
      _
    // Predicated region
    $region38: #{_fwd.1} parent=1 // pred_check
      _
    $region39: #{_fwd.1} parent=1 // pred_check_branch
      %153 = sbr.rel (0) target = $region41
    $region40: #{_fwd.1} parent=1 // pred_region
      %155 = dma.done [#allocation4], 64
    $region41: #{_fwd.1} parent=1 // pred_fallthru
      _
    %156 = vsyncpa [#allocation3], 1
    %157 = vsyncpa [#allocation4], 1

</llo_original>
